<compile_context>
chip_gen: v7x
topology: tpu7x:2x2x1
jax: 0.10.0
libtpu: 0.0.40
codegen_flags: <defaults>
</compile_context>

<pallas_src>
import jax
import jax.numpy as jnp
from jax.experimental import pallas as pl
from jax.experimental.pallas import tpu as pltpu


def gab_kernel(x_ref, g_ref, wx_ref, wg_ref, b_ref, o_ref):
    # Blocks: x (1, Cx, T), g (1, Cg, T), wx (Cout, Cx), wg (Cout, Cg),
    #         b (Cout, 1), out (1, Cx, T).  Pixels are on the lane axis.
    x = x_ref[0].astype(jnp.float32)            # (Cx, T)
    g = g_ref[0].astype(jnp.float32)            # (Cg, T)

    ga = (jnp.dot(wx_ref[...], x, preferred_element_type=jnp.float32)
          + jnp.dot(wg_ref[...], g, preferred_element_type=jnp.float32)
          + b_ref[...])                         # (Cout, T), bias bcast over lanes
    ga = jnp.maximum(ga, 0.0)                   # ReLU

    # out = x * ga  (elementwise; x_in_channel == out_channel)
    o_ref[0] = (x * ga).astype(o_ref.dtype)


def guidance_attention_block(x_nchw, g_nchw, params, *, tile_pixels=2048):
    """x_nchw: (B, Cx, H, W); g_nchw: (B, Cg, H, W). Returns (B, Cx, H, W)."""
    wx, bx, wg, bg, wga, bga = params
    B, Cx, H, W = x_nchw.shape
    Cg = g_nchw.shape[1]
    Cout = wx.shape[0]
    assert Cx == Cout, "x * ga requires x_in_channel == out_channel"

    # ---- fuse the three 1x1 convs into two (exact, done once in the wrapper)
    wx_f = (wga @ wx).astype(jnp.float32)                    # (Cout, Cx)
    wg_f = (wga @ wg).astype(jnp.float32)                    # (Cout, Cg)
    b_f = (wga @ (bx + bg) + bga).astype(jnp.float32)        # (Cout,)
    b_f2 = b_f.reshape(Cout, 1)

    # ---- NCHW -> (B, C, N); pixels on the lane axis (no transposes needed)
    N = H * W
    x3 = x_nchw.reshape(B, Cx, N)
    g3 = g_nchw.reshape(B, Cg, N)

    # ---- pick a lane tile (multiple of 128) and pad the pixel axis to it
    def round_up(a, m):
        return ((a + m - 1) // m) * m

    tile = min(int(tile_pixels), round_up(N, 128))
    tile = round_up(tile, 128)
    Np = round_up(N, tile)
    pad = Np - N
    if pad:
        x3 = jnp.pad(x3, ((0, 0), (0, 0), (0, pad)))
        g3 = jnp.pad(g3, ((0, 0), (0, 0), (0, pad)))

    grid = (B, Np // tile)

    out3 = pl.pallas_call(
        gab_kernel,
        out_shape=jax.ShapeDtypeStruct((B, Cx, Np), x_nchw.dtype),
        grid_spec=pl.GridSpec(
            grid=grid,
            in_specs=[
                pl.BlockSpec((1, Cx, tile), lambda b, i: (b, 0, i)),   # x tile
                pl.BlockSpec((1, Cg, tile), lambda b, i: (b, 0, i)),   # g tile
                pl.BlockSpec((Cout, Cx), lambda b, i: (0, 0)),         # Wx'
                pl.BlockSpec((Cout, Cg), lambda b, i: (0, 0)),         # Wg'
                pl.BlockSpec((Cout, 1), lambda b, i: (0, 0)),          # b'
            ],
            out_specs=pl.BlockSpec((1, Cx, tile), lambda b, i: (b, 0, i)),
        ),
        compiler_params=pltpu.CompilerParams(
            dimension_semantics=("parallel", "parallel")),
    )(x3, g3, wx_f, wg_f, b_f2)

    if pad:
        out3 = out3[:, :, :N]
    return out3.reshape(B, Cx, H, W)


def reference_jax(x_nchw, g_nchw, params):
    """Pure-JAX reference with the ORIGINAL (unfused) three-conv semantics."""
    wx, bx, wg, bg, wga, bga = params
    B, Cx, H, W = x_nchw.shape
    Cg = g_nchw.shape[1]
    x3 = x_nchw.reshape(B, Cx, H * W).astype(jnp.float32)
    g3 = g_nchw.reshape(B, Cg, H * W).astype(jnp.float32)
    h = (jnp.einsum('oc,bcn->bon', wx, x3) + bx[:, None]
         + jnp.einsum('oc,bcn->bon', wg, g3) + bg[:, None])
    ga = jnp.maximum(jnp.einsum('oc,bcn->bon', wga, h) + bga[:, None], 0.0)
    out = x3 * ga
    return out.reshape(B, Cx, H, W).astype(x_nchw.dtype)


def init_params(key, x_in_channel, g_in_channel, out_channel):
    """Deterministic synthetic init.  Weights are the (Cout, Cin) matrices of
    the PyTorch Conv2d(kernel_size=1) layers (i.e. conv weight squeezed)."""
    k1, k2, k3, k4, k5, k6 = jax.random.split(key, 6)
    wx = jax.random.normal(k1, (out_channel, x_in_channel), jnp.float32) * 0.1
    bx = jax.random.normal(k2, (out_channel,), jnp.float32) * 0.1
    wg = jax.random.normal(k3, (out_channel, g_in_channel), jnp.float32) * 0.1
    bg = jax.random.normal(k4, (out_channel,), jnp.float32) * 0.1
    wga = jax.random.normal(k5, (out_channel, out_channel), jnp.float32) * 0.1
    bga = jax.random.normal(k6, (out_channel,), jnp.float32) * 0.1
    return (wx, bx, wg, bg, wga, bga)


if __name__ == "__main__":
    # Small shapes consistent with the module; x * ga requires
    # x_in_channel == out_channel.
    B, H, W = 2, 16, 16
    x_in_channel, g_in_channel, out_channel = 8, 4, 8

    key = jax.random.PRNGKey(0)
    kx, kg, kp = jax.random.split(key, 3)
    x = jax.random.normal(kx, (B, x_in_channel, H, W), jnp.float32)
    g = jax.random.normal(kg, (B, g_in_channel, H, W), jnp.float32)
    params = init_params(kp, x_in_channel, g_in_channel, out_channel)

    out = guidance_attention_block(x, g, params)
    out = jax.block_until_ready(out)

    ref = jax.block_until_ready(reference_jax(x, g, params))
    assert out.shape == (B, x_in_channel, H, W)
    # Tolerance slightly loosened: the (exact) algebraic conv fusion reorders
    # f32 accumulation vs. the unfused reference.
    assert jnp.allclose(out, ref, atol=1e-4, rtol=1e-4), "mismatch vs reference"

    print("KERNEL_OK")
</pallas_src>

<mosaic_0001>
module attributes {stable_mosaic.version = 11 : i64} {
  func.func @gab_kernel(%arg0: i32, %arg1: i32, %arg2: memref<1x8x256xf32, #tpu.memory_space<vmem>>, %arg3: memref<1x4x256xf32, #tpu.memory_space<vmem>>, %arg4: memref<8x8xf32, #tpu.memory_space<vmem>>, %arg5: memref<8x4xf32, #tpu.memory_space<vmem>>, %arg6: memref<8x1xf32, #tpu.memory_space<vmem>>, %arg7: memref<1x8x256xf32, #tpu.memory_space<vmem>>) attributes {dimension_semantics = [#tpu.dimension_semantics<parallel>, #tpu.dimension_semantics<parallel>], iteration_bounds = array<i64: 2, 1>, scalar_prefetch = 0 : i64, scratch_operands = 0 : i64, tpu.core_type = #tpu.core_type<tc>, window_params = [{transform_indices = @transform_0, window_bounds = array<i64: 1, 8, 256>}, {transform_indices = @transform_1, window_bounds = array<i64: 1, 4, 256>}, {pipeline_mode = #tpu.pipeline_mode<synchronous>, transform_indices = @transform_2, window_bounds = array<i64: 8, 8>}, {pipeline_mode = #tpu.pipeline_mode<synchronous>, transform_indices = @transform_3, window_bounds = array<i64: 8, 4>}, {pipeline_mode = #tpu.pipeline_mode<synchronous>, transform_indices = @transform_4, window_bounds = array<i64: 8, 1>}, {transform_indices = @transform_5, window_bounds = array<i64: 1, 8, 256>}]} {
    %c0 = arith.constant 0 : index
    %c0_0 = arith.constant 0 : index
    %c0_1 = arith.constant 0 : index
    %0 = vector.load %arg2[%c0, %c0_0, %c0_1] : memref<1x8x256xf32, #tpu.memory_space<vmem>>, vector<1x8x256xf32>
    %1 = vector.shape_cast %0 : vector<1x8x256xf32> to vector<8x256xf32>
    %c0_2 = arith.constant 0 : index
    %c0_3 = arith.constant 0 : index
    %c0_4 = arith.constant 0 : index
    %2 = vector.load %arg3[%c0_2, %c0_3, %c0_4] : memref<1x4x256xf32, #tpu.memory_space<vmem>>, vector<1x4x256xf32>
    %3 = vector.shape_cast %2 : vector<1x4x256xf32> to vector<4x256xf32>
    %c0_5 = arith.constant 0 : index
    %c0_6 = arith.constant 0 : index
    %4 = vector.load %arg4[%c0_5, %c0_6] : memref<8x8xf32, #tpu.memory_space<vmem>>, vector<8x8xf32>
    %cst = arith.constant dense<0.000000e+00> : vector<8x256xf32>
    %5 = tpu.matmul %4, %1, %cst {dimension_numbers = #tpu.dot_dimension_numbers<[1], [0], [0], [1], [0, 0, 1, 1], [], []>} : vector<8x8xf32>, vector<8x256xf32>, vector<8x256xf32> -> vector<8x256xf32>
    %c0_7 = arith.constant 0 : index
    %c0_8 = arith.constant 0 : index
    %6 = vector.load %arg5[%c0_7, %c0_8] : memref<8x4xf32, #tpu.memory_space<vmem>>, vector<8x4xf32>
    %cst_9 = arith.constant dense<0.000000e+00> : vector<8x256xf32>
    %7 = tpu.matmul %6, %3, %cst_9 {dimension_numbers = #tpu.dot_dimension_numbers<[1], [0], [0], [1], [0, 0, 1, 1], [], []>} : vector<8x4xf32>, vector<4x256xf32>, vector<8x256xf32> -> vector<8x256xf32>
    %8 = arith.addf %5, %7 : vector<8x256xf32>
    %c0_10 = arith.constant 0 : index
    %c0_11 = arith.constant 0 : index
    %9 = vector.load %arg6[%c0_10, %c0_11] : memref<8x1xf32, #tpu.memory_space<vmem>>, vector<8x1xf32>
    %10 = vector.broadcast %9 : vector<8x1xf32> to vector<8x256xf32>
    %11 = arith.addf %8, %10 : vector<8x256xf32>
    %cst_12 = arith.constant 0.000000e+00 : f32
    %12 = vector.broadcast %cst_12 : f32 to vector<8x256xf32>
    %13 = arith.maximumf %11, %12 : vector<8x256xf32>
    %14 = arith.mulf %1, %13 : vector<8x256xf32>
    %c0_13 = arith.constant 0 : index
    %c0_14 = arith.constant 0 : index
    %c0_15 = arith.constant 0 : index
    %15 = vector.load %arg7[%c0_13, %c0_14, %c0_15] : memref<1x8x256xf32, #tpu.memory_space<vmem>>, vector<1x8x256xf32>
    %16 = vector.shape_cast %15 : vector<1x8x256xf32> to vector<8x256xf32>
    %17 = vector.shape_cast %14 : vector<8x256xf32> to vector<1x8x256xf32>
    tpu.vector_store %arg7[%c0_13, %c0_14, %c0_15], %17 {strides = array<i32>} : memref<1x8x256xf32, #tpu.memory_space<vmem>>, vector<1x8x256xf32>,
    return
  }
  func.func @transform_0(%arg0: i32, %arg1: i32) -> (i32, i32, i32) {
    %c0_i32 = arith.constant 0 : i32
    %c0_i32_0 = arith.constant 0 : i32
    return %arg0, %c0_i32, %arg1 : i32, i32, i32
  }
  func.func @transform_1(%arg0: i32, %arg1: i32) -> (i32, i32, i32) {
    %c0_i32 = arith.constant 0 : i32
    %c0_i32_0 = arith.constant 0 : i32
    return %arg0, %c0_i32, %arg1 : i32, i32, i32
  }
  func.func @transform_2(%arg0: i32, %arg1: i32) -> (i32, i32) {
    %c0_i32 = arith.constant 0 : i32
    %c0_i32_0 = arith.constant 0 : i32
    %c0_i32_1 = arith.constant 0 : i32
    return %c0_i32, %c0_i32_0 : i32, i32
  }
  func.func @transform_3(%arg0: i32, %arg1: i32) -> (i32, i32) {
    %c0_i32 = arith.constant 0 : i32
    %c0_i32_0 = arith.constant 0 : i32
    %c0_i32_1 = arith.constant 0 : i32
    return %c0_i32, %c0_i32_0 : i32, i32
  }
  func.func @transform_4(%arg0: i32, %arg1: i32) -> (i32, i32) {
    %c0_i32 = arith.constant 0 : i32
    %c0_i32_0 = arith.constant 0 : i32
    %c0_i32_1 = arith.constant 0 : i32
    return %c0_i32, %c0_i32_0 : i32, i32
  }
  func.func @transform_5(%arg0: i32, %arg1: i32) -> (i32, i32, i32) {
    %c0_i32 = arith.constant 0 : i32
    %c0_i32_0 = arith.constant 0 : i32
    return %arg0, %c0_i32, %arg1 : i32, i32, i32
  }
}

</mosaic_0001>

<llo_original>
// kernel: tpu_custom_call.1
$region0: #{tpu_custom_call.1}
  #allocation0 [shape = 'u32[]', space=smem, size = 0x4, offset = 0x4, fixed_abs, tag = 'smem constant byte address 0x4 - core index']
  #allocation1 [shape = 'u32[144,128]{1,0:T(1,128)}', space=vmem, size = 0x12000, scoped, tag = 'internal scratch']
  %s0 = inlined_call_operand.hbm [shape: f32[2,8,256], index: 0, kind: input, shape index: {}]
  %s1 = inlined_call_operand.vmem [shape: f32[2,4,256], index: 1, kind: input, shape index: {}]
  %s2 = inlined_call_operand.vmem [shape: f32[8,8], index: 2, kind: input, shape index: {}]
  %s3 = inlined_call_operand.vmem [shape: f32[8,4], index: 3, kind: input, shape index: {}]
  %s4 = inlined_call_operand.vmem [shape: f32[8,1], index: 4, kind: input, shape index: {}]
  %s5 = inlined_call_operand.hbm [shape: f32[2,8,256], index: 5, kind: output, shape index: {}]
  %s6 = sld [smem:[#allocation0]]
  $region57: #{tpu_custom_call.1} parent=0
    _
  %s8 = ssub.s32 1, %s6
  %s9 = scalar_select 0, %s8, %s6
  $region1: #{tpu_custom_call.1} parent=0
    #allocation2 [shape = 'u8[16384]{0}', space=vmem, size = 0x4000, scoped, tag = 'input window, operand 0']
    #allocation3 [shape = 's32[2]{0}', space=sflag, size = 0x8, scoped, tag = 'scoped memory for tpu_custom_call.1']
    #allocation4 [shape = 's32[2]{0}', space=sflag, size = 0x8, scoped, tag = 'scoped memory for tpu_custom_call.1']
    #allocation5 [shape = 'u8[16384]{0}', space=vmem, size = 0x4000, scoped, tag = 'output window, operand 0']
    %10 = vsyncpa [#allocation3], 0
    %s11 = scalar_lea.sflag [#allocation3], 1
    %12 = vsyncpa %s11, 0
    %13 = vsyncpa [#allocation4], 0
    %s14 = scalar_lea.sflag [#allocation4], 1
    %15 = vsyncpa %s14, 0
    loop: start=0, step=1, limit=4
    $region2: #{tpu_custom_call.1} parent=1 // loop_pre_header
      _
    $region3: #{tpu_custom_call.1} parent=1 // loop_header
      %s17 = sphi 0, %s21
      %p18 = scmp.ge.s32.totalorder %s17, 4
      %s24 = sphi 0, %s36
      %s25 = sphi 0, %s32
      %s26 = sphi 0, %s24
      %s27 = sphi 0, %s25
      %s28 = sphi 0, %s26
      %s29 = sphi 0, %s27
      %s41 = sphi 0, %s43
      %s44 = sphi 0, %s41
      %s45 = sphi 0, %s44
      %s61 = sphi 0, %s45
      %s69 = sphi 0, %s71
      %s72 = sphi 0, %s69
      %s73 = sphi 0, %s72
      %s89 = sphi 0, %s73
      %s93 = sphi 0, %s93
      %s95 = sphi 0, %s93
      %s96 = sphi 0, %s95
      %s110 = sphi 0, %s96
      %s114 = sphi 0, %s114
      %s116 = sphi 0, %s114
      %s117 = sphi 0, %s116
      %s131 = sphi 0, %s117
      %s135 = sphi 0, %s135
      %s137 = sphi 0, %s135
      %s138 = sphi 0, %s137
      %s152 = sphi 0, %s138
      %s160 = sphi 0, %s162
      %s163 = sphi 0, %s160
      %s164 = sphi 0, %s163
      %s180 = sphi 0, %s164
    $region4: #{tpu_custom_call.1} parent=1 // loop_header_branch
      %20 = sbr.rel (%p18) target = $region8
    $region5: #{tpu_custom_call.1} parent=1 // loop_body
      %s22 = ssub.s32 %s17, 1
      %s23 = ssub.s32 %s17, 2
      %s30 = sadd.s32 1, %s25
      %p31 = scmp.ge.s32.totalorder %s30, 1
      %s32 = scalar_select %p31, 0, %s30
      %s33 = sadd.s32 1, %s24
      %s34 = scalar_select %p31, %s33, %s24
      %p35 = scmp.ge.s32.totalorder %s34, 2
      %s36 = scalar_select %p35, 0, %s34
      %s37 = ssub.s32 %s24, %s36
      %s38 = ssub.s32 %s25, %s32
      %s39 = sor.u32 %s37, %s38
      %p40 = scmp.eq.s32.totalorder %s39, 0
      %s42 = sadd.s32 %s41, 1
      %s43 = scalar_select %p40, %s41, %s42
      %p46 = pneg %p40
      %p47 = scmp.eq.s32.totalorder %s17, 1
      %p48 = por %p46, %p47
      %p49 = scmp.ne.s32.totalorder %s41, %s44
      %p50 = scmp.eq.s32.totalorder %s17, 0
      %p51 = por %p49, %p50
      %p52 = scmp.ne.s32.totalorder %s41, %s44
      %p53 = scmp.eq.s32.totalorder %s22, 1
      %p54 = por %p52, %p53
      %p55 = scmp.ne.s32.totalorder %s44, %s45
      %p56 = scmp.eq.s32.totalorder %s22, 0
      %p57 = por %p55, %p56
      %p58 = scmp.ne.s32.totalorder %s44, %s45
      %p59 = scmp.eq.s32.totalorder %s23, 1
      %p60 = por %p58, %p59
      %p62 = scmp.ne.s32.totalorder %s45, %s61
      %p63 = scmp.eq.s32.totalorder %s23, 0
      %p64 = por %p62, %p63
      %s65 = ssub.s32 %s24, %s36
      %s66 = ssub.s32 %s25, %s32
      %s67 = sor.u32 %s65, %s66
      %p68 = scmp.eq.s32.totalorder %s67, 0
      %s70 = sadd.s32 %s69, 1
      %s71 = scalar_select %p68, %s69, %s70
      %p74 = pneg %p68
      %p75 = scmp.eq.s32.totalorder %s17, 1
      %p76 = por %p74, %p75
      %p77 = scmp.ne.s32.totalorder %s69, %s72
      %p78 = scmp.eq.s32.totalorder %s17, 0
      %p79 = por %p77, %p78
      %p80 = scmp.ne.s32.totalorder %s69, %s72
      %p81 = scmp.eq.s32.totalorder %s22, 1
      %p82 = por %p80, %p81
      %p83 = scmp.ne.s32.totalorder %s72, %s73
      %p84 = scmp.eq.s32.totalorder %s22, 0
      %p85 = por %p83, %p84
      %p86 = scmp.ne.s32.totalorder %s72, %s73
      %p87 = scmp.eq.s32.totalorder %s23, 1
      %p88 = por %p86, %p87
      %p90 = scmp.ne.s32.totalorder %s73, %s89
      %p91 = scmp.eq.s32.totalorder %s23, 0
      %p92 = por %p90, %p91
      %s94 = sadd.s32 %s93, 1
      %p97 = scmp.eq.s32.totalorder %s17, 1
      %p98 = scmp.ne.s32.totalorder %s93, %s95
      %p99 = scmp.eq.s32.totalorder %s17, 0
      %p100 = por %p98, %p99
      %p101 = scmp.ne.s32.totalorder %s93, %s95
      %p102 = scmp.eq.s32.totalorder %s22, 1
      %p103 = por %p101, %p102
      %p104 = scmp.ne.s32.totalorder %s95, %s96
      %p105 = scmp.eq.s32.totalorder %s22, 0
      %p106 = por %p104, %p105
      %p107 = scmp.ne.s32.totalorder %s95, %s96
      %p108 = scmp.eq.s32.totalorder %s23, 1
      %p109 = por %p107, %p108
      %p111 = scmp.ne.s32.totalorder %s96, %s110
      %p112 = scmp.eq.s32.totalorder %s23, 0
      %p113 = por %p111, %p112
      %s115 = sadd.s32 %s114, 1
      %p118 = scmp.eq.s32.totalorder %s17, 1
      %p119 = scmp.ne.s32.totalorder %s114, %s116
      %p120 = scmp.eq.s32.totalorder %s17, 0
      %p121 = por %p119, %p120
      %p122 = scmp.ne.s32.totalorder %s114, %s116
      %p123 = scmp.eq.s32.totalorder %s22, 1
      %p124 = por %p122, %p123
      %p125 = scmp.ne.s32.totalorder %s116, %s117
      %p126 = scmp.eq.s32.totalorder %s22, 0
      %p127 = por %p125, %p126
      %p128 = scmp.ne.s32.totalorder %s116, %s117
      %p129 = scmp.eq.s32.totalorder %s23, 1
      %p130 = por %p128, %p129
      %p132 = scmp.ne.s32.totalorder %s117, %s131
      %p133 = scmp.eq.s32.totalorder %s23, 0
      %p134 = por %p132, %p133
      %s136 = sadd.s32 %s135, 1
      %p139 = scmp.eq.s32.totalorder %s17, 1
      %p140 = scmp.ne.s32.totalorder %s135, %s137
      %p141 = scmp.eq.s32.totalorder %s17, 0
      %p142 = por %p140, %p141
      %p143 = scmp.ne.s32.totalorder %s135, %s137
      %p144 = scmp.eq.s32.totalorder %s22, 1
      %p145 = por %p143, %p144
      %p146 = scmp.ne.s32.totalorder %s137, %s138
      %p147 = scmp.eq.s32.totalorder %s22, 0
      %p148 = por %p146, %p147
      %p149 = scmp.ne.s32.totalorder %s137, %s138
      %p150 = scmp.eq.s32.totalorder %s23, 1
      %p151 = por %p149, %p150
      %p153 = scmp.ne.s32.totalorder %s138, %s152
      %p154 = scmp.eq.s32.totalorder %s23, 0
      %p155 = por %p153, %p154
      %s156 = ssub.s32 %s24, %s36
      %s157 = ssub.s32 %s25, %s32
      %s158 = sor.u32 %s156, %s157
      %p159 = scmp.eq.s32.totalorder %s158, 0
      %s161 = sadd.s32 %s160, 1
      %s162 = scalar_select %p159, %s160, %s161
      %p165 = pneg %p159
      %p166 = scmp.eq.s32.totalorder %s17, 1
      %p167 = por %p165, %p166
      %p168 = scmp.ne.s32.totalorder %s160, %s163
      %p169 = scmp.eq.s32.totalorder %s17, 0
      %p170 = por %p168, %p169
      %p171 = scmp.ne.s32.totalorder %s160, %s163
      %p172 = scmp.eq.s32.totalorder %s22, 1
      %p173 = por %p171, %p172
      %p174 = scmp.ne.s32.totalorder %s163, %s164
      %p175 = scmp.eq.s32.totalorder %s22, 0
      %p176 = por %p174, %p175
      %p177 = scmp.ne.s32.totalorder %s163, %s164
      %p178 = scmp.eq.s32.totalorder %s23, 1
      %p179 = por %p177, %p178
      %p181 = scmp.ne.s32.totalorder %s164, %s180
      %p182 = scmp.eq.s32.totalorder %s23, 0
      %p183 = por %p181, %p182
      %p184 = scmp.le.s32.totalorder 1, %s17
      %p185 = scmp.lt.s32.totalorder %s17, 3
      %p186 = pnand %p184, %p185
      %p187 = pneg %p186
      // Predicated region
      $region9: #{tpu_custom_call.1} parent=5 // pred_check
        _
      $region10: #{tpu_custom_call.1} parent=5 // pred_check_branch
        %189 = sbr.rel (%p186) target = $region12
      $region11: #{tpu_custom_call.1} parent=5 // pred_region
        %s190 = ssub.s32 %s17, 1
        // Predicated region
        $region13: #{tpu_custom_call.1} parent=11 // pred_check
          %p191 = pneg %p106
        $region14: #{tpu_custom_call.1} parent=11 // pred_check_branch
          %193 = sbr.rel (%p191) target = $region16
        $region15: #{tpu_custom_call.1} parent=11 // pred_region
          _
        $region16: #{tpu_custom_call.1} parent=11 // pred_fallthru
          _
        // Predicated region
        $region17: #{tpu_custom_call.1} parent=11 // pred_check
          %p194 = pneg %p127
        $region18: #{tpu_custom_call.1} parent=11 // pred_check_branch
          %196 = sbr.rel (%p194) target = $region20
        $region19: #{tpu_custom_call.1} parent=11 // pred_region
          _
        $region20: #{tpu_custom_call.1} parent=11 // pred_fallthru
          _
        // Predicated region
        $region21: #{tpu_custom_call.1} parent=11 // pred_check
          %p197 = pneg %p148
        $region22: #{tpu_custom_call.1} parent=11 // pred_check_branch
          %199 = sbr.rel (%p197) target = $region24
        $region23: #{tpu_custom_call.1} parent=11 // pred_region
          _
        $region24: #{tpu_custom_call.1} parent=11 // pred_fallthru
          _
      $region12: #{tpu_custom_call.1} parent=5 // pred_fallthru
        _
      %p200 = scmp.lt.s32.totalorder %s17, 2
      // Predicated region
      $region25: #{tpu_custom_call.1} parent=5 // pred_check
        %p201 = pneg %p200
      $region26: #{tpu_custom_call.1} parent=5 // pred_check_branch
        %203 = sbr.rel (%p201) target = $region28
      $region27: #{tpu_custom_call.1} parent=5 // pred_region
        // Predicated region
        $region29: #{tpu_custom_call.1} parent=27 // pred_check
          %p204 = pneg %p51
        $region30: #{tpu_custom_call.1} parent=27 // pred_check_branch
          %206 = sbr.rel (%p204) target = $region32
        $region31: #{tpu_custom_call.1} parent=27 // pred_region
          %s207 = sand.u32 %s41, 1
          %s208 = scalar_lea.sflag [#allocation3], %s207
          %s209 = sand.u32 %s41, 1
          %s210 = smul.addr %s209, 16
          %s211 = scalar_lea.vmem [#allocation2], %s210
          %s212 = smul.u32 2, %s25
          %s214 = ssub.s32 256, 256
          %215 = vsyncadd %s208, %s214
          %s216 = smul.addr %s24, 2
          %s217 = sadd.s32 %s212, %s216
          %s218 = smul.addr %s217, 128
          %s219 = scalar_lea.hbm %s0, %s218
          %s221 = sshll.u32 %s211, 4
          %s222 = int_to_ptr.vmem [resolvable:$true] %s221
          %224 = dma.hbm_to_vmem [thread:$0]  %s219, 256, %s222, %s208
        $region32: #{tpu_custom_call.1} parent=27 // pred_fallthru
          _
        // Predicated region
        $region33: #{tpu_custom_call.1} parent=27 // pred_check
          %p225 = pneg %p79
        $region34: #{tpu_custom_call.1} parent=27 // pred_check_branch
          %227 = sbr.rel (%p225) target = $region36
        $region35: #{tpu_custom_call.1} parent=27 // pred_region
          %s228 = smul.u32 2, %s25
          %p229 = scmp.lt.s32.totalorder %s24, 1
          %s230 = scalar_select %p229, %s24, 1
          %p231 = scmp.lt.s32.totalorder %s228, 1
          %s232 = scalar_select %p231, %s228, 1
          %s233 = smul.addr %s230, 2
          %s234 = sadd.s32 %s232, %s233
          %s235 = smul.addr %s234, 4
          %s236 = scalar_lea.vmem %s1, %s235
          %s237 = smul.u32 2, %s25
        $region36: #{tpu_custom_call.1} parent=27 // pred_fallthru
          _
      $region28: #{tpu_custom_call.1} parent=5 // pred_fallthru
        _
      %p238 = scmp.le.s32.totalorder 1, %s17
      %p239 = scmp.lt.s32.totalorder %s17, 3
      %p240 = pnand %p238, %p239
      %p241 = pneg %p240
      // Predicated region
      $region37: #{tpu_custom_call.1} parent=5 // pred_check
        _
      $region38: #{tpu_custom_call.1} parent=5 // pred_check_branch
        %243 = sbr.rel (%p240) target = $region40
      $region39: #{tpu_custom_call.1} parent=5 // pred_region
        %s244 = ssub.s32 %s17, 1
        %s245 = sand.u32 %s44, 1
        %s246 = scalar_lea.sflag [#allocation3], %s245
        %s247 = sand.u32 %s44, 1
        %s248 = smul.addr %s247, 16
        %s249 = scalar_lea.vmem [#allocation2], %s248
        // Predicated region
        $region41: #{tpu_custom_call.1} parent=39 // pred_check
          %p250 = pneg %p57
        $region42: #{tpu_custom_call.1} parent=39 // pred_check_branch
          %252 = sbr.rel (%p250) target = $region44
        $region43: #{tpu_custom_call.1} parent=39 // pred_region
          %253 = dma.done %s246, 256
        $region44: #{tpu_custom_call.1} parent=39 // pred_fallthru
          _
        %s254 = sand.u32 %s44, 1
        %s255 = scalar_lea.sflag [#allocation3], %s254
        %s256 = sand.u32 %s44, 1
        %s257 = smul.addr %s256, 16
        %s258 = scalar_lea.vmem [#allocation2], %s257
        %p259 = pneg %p57
        %p260 = pneg %p54
        %s261 = smul.u32 2, %s27
        %p262 = scmp.lt.s32.totalorder %s26, 1
        %s263 = scalar_select %p262, %s26, 1
        %p264 = scmp.lt.s32.totalorder %s261, 1
        %s265 = scalar_select %p264, %s261, 1
        %s266 = smul.addr %s263, 2
        %s267 = sadd.s32 %s265, %s266
        %s268 = smul.addr %s267, 4
        %s269 = scalar_lea.vmem %s1, %s268
        %p270 = pneg %p85
        %p271 = pneg %p82
        %p272 = pneg %p106
        %p273 = pneg %p103
        %p274 = pneg %p127
        %p275 = pneg %p124
        %p276 = pneg %p148
        %p277 = pneg %p145
        %p278 = pneg %p176
        %p279 = pneg %p173
        %s280 = sand.u32 %s163, 1
        %s281 = scalar_lea.sflag [#allocation4], %s280
        %s282 = sand.u32 %s163, 1
        %s283 = smul.addr %s282, 16
        %s284 = scalar_lea.vmem [#allocation5], %s283
        %s285 = smul.u32 2, %s27
        %s286 = smul.u32 2, %s27
        %p287 = scmp.lt.s32.totalorder %s26, 1
        %s288 = scalar_select %p287, %s26, 1
        %p289 = scmp.lt.s32.totalorder %s286, 1
        %s290 = scalar_select %p289, %s286, 1
        %s291 = smul.addr %s288, 2
        %s292 = sadd.s32 %s290, %s291
        %s293 = smul.addr %s292, 4
        %s294 = scalar_lea.vmem %s1, %s293
        %s295 = smul.u32 2, %s27
        %s296 = smul.u32 2, %s27
        %v297 = vld [vmem:[%s249] sm:$0xff]
        %v298 = vld [vmem:[%s249 + $0x8] sm:$0xff]
        %v299 = vld [vmem:[%s294] sm:$0xff]
        %v300 = vld [vmem:[%s2] sm:$0xff]
        %v301 = vld [vmem:[%s3] sm:$0xff]
        %v303 = vcombine.high %v299, %v299
        %vm304 = vcmask 31744
        %v306 = vsel %vm304, %v301, 0
        %vm308 = vcmask 1043456
        %v309 = vsel %vm308, %v299, 0
        %v311 = vsel %vm308, %v303, 0
        %313 = vmatprep.subr.mxu0 %v311
        %314 = vmatpush1.msra.mxu0 %v309
        %315 = vmatprep.subr.mxu0 0.0
        %316 = vmatpush1.msra.mxu0 0.0
        %317 = vmatprep.subr.mxu0 0.0
        %318 = vmatpush1.msra.mxu0 0.0
        %319 = vmatprep.subr.mxu0 0.0
        %320 = vmatpush1.msra.mxu0 0.0
        %321 = vmatprep.subr.mxu0 0.0
        %322 = vmatpush1.msra.mxu0 0.0
        %323 = vmatprep.subr.mxu0 0.0
        %324 = vmatpush1.msra.mxu0 0.0
        %325 = vmatprep.subr.mxu0 0.0
        %326 = vmatpush1.msra.mxu0 0.0
        %327 = vmatprep.subr.mxu0 0.0
        %328 = vmatpush1.msra.mxu0 0.0
        %329 = vmatprep.subr.mxu0 0.0
        %330 = vmatpush1.msra.mxu0 0.0
        %331 = vmatprep.subr.mxu0 0.0
        %332 = vmatpush1.msra.mxu0 0.0
        %333 = vmatprep.subr.mxu0 0.0
        %334 = vmatpush1.msra.mxu0 0.0
        %335 = vmatprep.subr.mxu0 0.0
        %336 = vmatpush1.msra.mxu0 0.0
        %337 = vmatprep.subr.mxu0 0.0
        %338 = vmatpush1.msra.mxu0 0.0
        %339 = vmatprep.subr.mxu0 0.0
        %340 = vmatpush1.msra.mxu0 0.0
        %341 = vmatprep.subr.mxu0 0.0
        %342 = vmatpush1.msra.mxu0 0.0
        %343 = vmatprep.subr.mxu0 0.0
        %344 = vmatpush1.msra.mxu0 0.0
        %345 = vmatprep.subr.mxu0 0.0
        %346 = vmatpush1.msra.mxu0 0.0
        %347 = vmatprep.subr.mxu0 0.0
        %348 = vmatpush1.msra.mxu0 0.0
        %349 = vmatprep.subr.mxu0 0.0
        %350 = vmatpush1.msra.mxu0 0.0
        %351 = vmatprep.subr.mxu0 0.0
        %352 = vmatpush1.msra.mxu0 0.0
        %353 = vmatprep.subr.mxu0 0.0
        %354 = vmatpush1.msra.mxu0 0.0
        %355 = vmatprep.subr.mxu0 0.0
        %356 = vmatpush1.msra.mxu0 0.0
        %357 = vmatprep.subr.mxu0 0.0
        %358 = vmatpush1.msra.mxu0 0.0
        %359 = vmatprep.subr.mxu0 0.0
        %360 = vmatpush1.msra.mxu0 0.0
        %361 = vmatprep.subr.mxu0 0.0
        %362 = vmatpush1.msra.mxu0 0.0
        %363 = vmatprep.subr.mxu0 0.0
        %364 = vmatpush1.msra.mxu0 0.0
        %365 = vmatprep.subr.mxu0 0.0
        %366 = vmatpush1.msra.mxu0 0.0
        %367 = vmatprep.subr.mxu0 0.0
        %368 = vmatpush1.msra.mxu0 0.0
        %369 = vmatprep.subr.mxu0 0.0
        %370 = vmatpush1.msra.mxu0 0.0
        %371 = vmatprep.subr.mxu0 0.0
        %372 = vmatpush1.msra.mxu0 0.0
        %373 = vmatprep.subr.mxu0 0.0
        %374 = vmatpush1.msra.mxu0 0.0
        %375 = vmatprep.subr.mxu0 0.0
        %376 = vmatpush1.msra.mxu0 0.0
        %377 = vmatprep.mubr.f32.mxu0 0.0
        %378 = vmatmul.mubr.f32.gmra.mrb[0].mxu0 %v306
        %v379 = vpop.f32.mrb[0].mxu0
        %v380 = vadd.f32 0.0, %v379
        %v381 = vpop.f32.mrb[0].mxu0
        %v382 = vadd.f32 0.0, %v381
        %383 = vdwg.mxu0
        %vm384 = vcmask 64512
        %v386 = vsel %vm384, %v300, 0
        %388 = vmatprep.subr.mxu0 %v298
        %389 = vmatpush1.msra.mxu0 %v297
        %390 = vmatprep.subr.mxu0 0.0
        %391 = vmatpush1.msra.mxu0 0.0
        %392 = vmatprep.subr.mxu0 0.0
        %393 = vmatpush1.msra.mxu0 0.0
        %394 = vmatprep.subr.mxu0 0.0
        %395 = vmatpush1.msra.mxu0 0.0
        %396 = vmatprep.subr.mxu0 0.0
        %397 = vmatpush1.msra.mxu0 0.0
        %398 = vmatprep.subr.mxu0 0.0
        %399 = vmatpush1.msra.mxu0 0.0
        %400 = vmatprep.subr.mxu0 0.0
        %401 = vmatpush1.msra.mxu0 0.0
        %402 = vmatprep.subr.mxu0 0.0
        %403 = vmatpush1.msra.mxu0 0.0
        %404 = vmatprep.subr.mxu0 0.0
        %405 = vmatpush1.msra.mxu0 0.0
        %406 = vmatprep.subr.mxu0 0.0
        %407 = vmatpush1.msra.mxu0 0.0
        %408 = vmatprep.subr.mxu0 0.0
        %409 = vmatpush1.msra.mxu0 0.0
        %410 = vmatprep.subr.mxu0 0.0
        %411 = vmatpush1.msra.mxu0 0.0
        %412 = vmatprep.subr.mxu0 0.0
        %413 = vmatpush1.msra.mxu0 0.0
        %414 = vmatprep.subr.mxu0 0.0
        %415 = vmatpush1.msra.mxu0 0.0
        %416 = vmatprep.subr.mxu0 0.0
        %417 = vmatpush1.msra.mxu0 0.0
        %418 = vmatprep.subr.mxu0 0.0
        %419 = vmatpush1.msra.mxu0 0.0
        %420 = vmatprep.subr.mxu0 0.0
        %421 = vmatpush1.msra.mxu0 0.0
        %422 = vmatprep.subr.mxu0 0.0
        %423 = vmatpush1.msra.mxu0 0.0
        %424 = vmatprep.subr.mxu0 0.0
        %425 = vmatpush1.msra.mxu0 0.0
        %426 = vmatprep.subr.mxu0 0.0
        %427 = vmatpush1.msra.mxu0 0.0
        %428 = vmatprep.subr.mxu0 0.0
        %429 = vmatpush1.msra.mxu0 0.0
        %430 = vmatprep.subr.mxu0 0.0
        %431 = vmatpush1.msra.mxu0 0.0
        %432 = vmatprep.subr.mxu0 0.0
        %433 = vmatpush1.msra.mxu0 0.0
        %434 = vmatprep.subr.mxu0 0.0
        %435 = vmatpush1.msra.mxu0 0.0
        %436 = vmatprep.subr.mxu0 0.0
        %437 = vmatpush1.msra.mxu0 0.0
        %438 = vmatprep.subr.mxu0 0.0
        %439 = vmatpush1.msra.mxu0 0.0
        %440 = vmatprep.subr.mxu0 0.0
        %441 = vmatpush1.msra.mxu0 0.0
        %442 = vmatprep.subr.mxu0 0.0
        %443 = vmatpush1.msra.mxu0 0.0
        %444 = vmatprep.subr.mxu0 0.0
        %445 = vmatpush1.msra.mxu0 0.0
        %446 = vmatprep.subr.mxu0 0.0
        %447 = vmatpush1.msra.mxu0 0.0
        %448 = vmatprep.subr.mxu0 0.0
        %449 = vmatpush1.msra.mxu0 0.0
        %450 = vmatprep.subr.mxu0 0.0
        %451 = vmatpush1.msra.mxu0 0.0
        %452 = vmatprep.mubr.f32.mxu0 0.0
        %453 = vmatmul.mubr.f32.gmra.mrb[0].mxu0 %v386
        %v454 = vpop.f32.mrb[0].mxu0
        %v455 = vadd.f32 %v380, %v454
        %v456 = vpop.f32.mrb[0].mxu0
        %v457 = vadd.f32 %v382, %v456
        %458 = vdwg.mxu0
        %v459 = vld [vmem:[%s4] sm:$0xff]
        %461 = vset.pattern.permute.xlu0 0
        %462 = vperm.xlu0 %461, %v459
        %v463 = vpop.permute.xlu0 %462
        %v465 = vadd.f32 %v455, %v463
        %v466 = vadd.f32 %v457, %v463
        %v467 = vmax.f32 %v465, 0.0
        %v468 = vmax.f32 %v466, 0.0
        %v469 = vmul.f32 %v297, %v467
        %v470 = vmul.f32 %v298, %v468
        %471 = vst [vmem:[%s284] sm:$0xff] %v469
        %472 = vst [vmem:[%s284 + $0x8] sm:$0xff] %v470
        %s473 = sand.u32 %s163, 1
        %s474 = scalar_lea.sflag [#allocation4], %s473
        %s475 = sand.u32 %s163, 1
        %s476 = smul.addr %s475, 16
        %s477 = scalar_lea.vmem [#allocation5], %s476
        // Predicated region
        $region45: #{tpu_custom_call.1} parent=39 // pred_check
          %p478 = pneg %p173
        $region46: #{tpu_custom_call.1} parent=39 // pred_check_branch
          %480 = sbr.rel (%p478) target = $region48
        $region47: #{tpu_custom_call.1} parent=39 // pred_region
          %s481 = smul.u32 2, %s27
          %s483 = ssub.s32 256, 256
          %484 = vsyncadd %s474, %s483
          %s485 = smul.addr %s26, 2
          %s486 = sadd.s32 %s481, %s485
          %s487 = smul.addr %s486, 128
          %s488 = scalar_lea.hbm %s5, %s487
          %s490 = sshll.u32 %s477, 4
          %s491 = int_to_ptr.vmem [resolvable:$true] %s490
          %493 = dma.vmem_to_hbm [thread:$0]  %s491, 256, %s488, %s474
        $region48: #{tpu_custom_call.1} parent=39 // pred_fallthru
          _
      $region40: #{tpu_custom_call.1} parent=5 // pred_fallthru
        _
      %p494 = scmp.le.s32.totalorder 2, %s17
      // Predicated region
      $region49: #{tpu_custom_call.1} parent=5 // pred_check
        %p495 = pneg %p494
      $region50: #{tpu_custom_call.1} parent=5 // pred_check_branch
        %497 = sbr.rel (%p495) target = $region52
      $region51: #{tpu_custom_call.1} parent=5 // pred_region
        %s498 = ssub.s32 %s17, 2
        // Predicated region
        $region53: #{tpu_custom_call.1} parent=51 // pred_check
          %p499 = pneg %p179
        $region54: #{tpu_custom_call.1} parent=51 // pred_check_branch
          %501 = sbr.rel (%p499) target = $region56
        $region55: #{tpu_custom_call.1} parent=51 // pred_region
          %s502 = sand.u32 %s164, 1
          %s503 = scalar_lea.sflag [#allocation4], %s502
          %s504 = sand.u32 %s164, 1
          %s505 = smul.addr %s504, 16
          %s506 = scalar_lea.vmem [#allocation5], %s505
          %507 = dma.done %s503, 256
        $region56: #{tpu_custom_call.1} parent=51 // pred_fallthru
          _
      $region52: #{tpu_custom_call.1} parent=5 // pred_fallthru
        _
    $region6: #{tpu_custom_call.1} parent=1 // loop_footer
      %s21 = sadd.s32 1, %s17
    $region7: #{tpu_custom_call.1} parent=1 // loop_footer_branch
      %16 = sbr.rel target = $region3
    $region8: #{tpu_custom_call.1} parent=1 // loop_exit
      _
    %508 = vsyncpa [#allocation3], 1
    %s509 = scalar_lea.sflag [#allocation3], 1
    %510 = vsyncpa %s509, 1
    %511 = vsyncpa [#allocation4], 1
    %s512 = scalar_lea.sflag [#allocation4], 1
    %513 = vsyncpa %s512, 1

</llo_original>
